<compile_context>
chip_gen: v7x
topology: tpu7x:2x2x1
jax: 0.10.0
libtpu: 0.0.40
codegen_flags: <defaults>
</compile_context>

<pallas_src>
import jax
import jax.numpy as jnp
import numpy as np
from jax.experimental import pallas as pl
from jax.experimental.pallas import tpu as pltpu

# Largest lane-axis (batch) tile.  Multiple of 128.  Per-block VMEM traffic at
# N=8 defenders+attackers is ~3 MB; double-buffered ~6 MB -> fits every chip.
_TILE_B_MAX = 32768


def _round_up(x: int, m: int) -> int:
    return ((x + m - 1) // m) * m


def _pick_tile_b(B: int) -> int:
    """Balanced lane-axis tile: big tiles for BW, >=2 blocks for v7x megacore."""
    if B < 1024:
        # Too small to benefit from splitting; single full-extent block
        # (also sidesteps the 128-lane divisibility rule for tiny B).
        return B
    n_blocks = max(-(-B // _TILE_B_MAX), 2)      # >=2 so both v7x TCs get work
    tile_b = _round_up(-(-B // n_blocks), 128)   # balanced, 128-lane aligned
    return min(tile_b, B)


def _presence_kernel(presence_ref, rand_ref, persist_ref, return_ref, loc_ref,
                     new_presence_ref, new_loc_ref):
    presence = presence_ref[...] != 0            # [N, TB] bool (vreg cast, free)
    rand = rand_ref[...]                         # [N, TB] f32
    persist = persist_ref[...]                   # [N, 1]  f32 (lane broadcast)
    ret = return_ref[...]                        # [N, 1]  f32

    return_mask = jnp.logical_and(jnp.logical_not(presence), rand < ret)
    leave_mask = jnp.logical_and(presence, rand >= persist)

    new_presence = jnp.logical_and(
        jnp.logical_or(presence, return_mask),
        jnp.logical_not(leave_mask),
    )
    new_presence_ref[...] = new_presence.astype(jnp.int8)

    # Defenders occupy rows [0, n_def): offset-0 sublane range, pure VPU select.
    n_def = new_loc_ref.shape[0]
    new_loc_ref[...] = jnp.where(return_mask[:n_def, :], jnp.int32(-1),
                                 loc_ref[...])


def presence_transition(presence, location, randomness_source,
                        persist_probs, return_probs):
    """presence: [N,B] int8 (0/1); location: [N_def,B] int32;
    randomness_source: [N,B] f32; persist/return_probs: [N] f32
    (agent axis ordered defenders-first).
    Returns (new_presence int8 [N,B], new_location int32 [N_def,B])."""
    N, B = presence.shape
    n_def = location.shape[0]
    assert location.shape == (n_def, B)
    assert randomness_source.shape == (N, B)

    # Tiny [N] params -> [N, 1] resident blocks (negligible, once per call).
    persist2d = persist_probs.reshape(N, 1).astype(jnp.float32)
    return2d = return_probs.reshape(N, 1).astype(jnp.float32)

    tile_b = _pick_tile_b(B)
    grid = (pl.cdiv(B, tile_b),)

    new_presence, new_loc = pl.pallas_call(
        _presence_kernel,
        out_shape=(
            jax.ShapeDtypeStruct((N, B), jnp.int8),
            jax.ShapeDtypeStruct((n_def, B), jnp.int32),
        ),
        grid=grid,
        in_specs=[
            pl.BlockSpec((N, tile_b), lambda i: (0, i)),       # presence
            pl.BlockSpec((N, tile_b), lambda i: (0, i)),       # randomness
            pl.BlockSpec((N, 1), lambda i: (0, 0)),            # persist (resident)
            pl.BlockSpec((N, 1), lambda i: (0, 0)),            # return  (resident)
            pl.BlockSpec((n_def, tile_b), lambda i: (0, i)),   # location
        ],
        out_specs=(
            pl.BlockSpec((N, tile_b), lambda i: (0, i)),
            pl.BlockSpec((n_def, tile_b), lambda i: (0, i)),
        ),
        # presence -> new_presence, location -> new_location buffer reuse.
        # (Donate these args in the caller's jit for true zero-copy aliasing.)
        input_output_aliases={0: 0, 4: 1},
        compiler_params=pltpu.CompilerParams(
            dimension_semantics=("parallel",),
            vmem_limit_bytes=32 * 1024 * 1024,
        ),
    )(presence, randomness_source, persist2d, return2d, location)

    return new_presence, new_loc


def _reference(presence_i8, location, rand, persist, ret):
    """NumPy reference in the same (agent-major, defenders-first) convention."""
    presence = np.asarray(presence_i8).astype(bool)
    loc = np.asarray(location).copy()
    rand = np.asarray(rand)
    persist = np.asarray(persist)[:, None]
    ret = np.asarray(ret)[:, None]
    return_mask = np.logical_and(np.logical_not(presence), rand < ret)
    leave_mask = np.logical_and(presence, rand >= persist)
    new_presence = presence.copy()
    new_presence[return_mask] = True
    new_presence[leave_mask] = False
    n_def = loc.shape[0]
    loc[return_mask[:n_def]] = -1
    return new_presence.astype(np.int8), loc


if __name__ == "__main__":
    key = jax.random.PRNGKey(0)
    B = 8                  # parallel environments (lane axis; grows in practice)
    num_attackers = 3
    num_defenders = 5
    N = num_attackers + num_defenders

    k1, k2, k3, k4, k5 = jax.random.split(key, 5)
    # Module buffers; agent axis ordered defenders-first.
    persist_probs = jax.random.uniform(k1, (N,), dtype=jnp.float32)
    return_probs = jax.random.uniform(k2, (N,), dtype=jnp.float32)

    # State + randomness source (agent-major, defenders-first, batch on lanes).
    presence = jax.random.bernoulli(k3, 0.5, (N, B)).astype(jnp.int8)
    location = jax.random.randint(k4, (num_defenders, B), 0, 10, dtype=jnp.int32)
    randomness_source = jax.random.uniform(k5, (N, B), dtype=jnp.float32)

    # Snapshot to host before the call (kernel aliases presence/location buffers).
    presence_np = np.asarray(presence)
    location_np = np.asarray(location)
    rand_np = np.asarray(randomness_source)
    persist_np = np.asarray(persist_probs)
    return_np = np.asarray(return_probs)

    transition = jax.jit(presence_transition)
    new_presence, new_location = transition(
        presence, location, randomness_source, persist_probs, return_probs)
    jax.block_until_ready(new_presence)
    jax.block_until_ready(new_location)

    ref_presence, ref_location = _reference(
        presence_np, location_np, rand_np, persist_np, return_np)

    assert np.array_equal(np.asarray(new_presence), ref_presence)
    assert np.array_equal(np.asarray(new_location), ref_location)
    print("KERNEL_OK")
</pallas_src>

<mosaic_0001>
module attributes {stable_mosaic.version = 11 : i64} {
  func.func @_presence_kernel(%arg0: i32, %arg1: memref<8x8xi8, #tpu.memory_space<vmem>>, %arg2: memref<8x8xf32, #tpu.memory_space<vmem>>, %arg3: memref<8x1xf32, #tpu.memory_space<vmem>>, %arg4: memref<8x1xf32, #tpu.memory_space<vmem>>, %arg5: memref<5x8xi32, #tpu.memory_space<vmem>>, %arg6: memref<8x8xi8, #tpu.memory_space<vmem>>, %arg7: memref<5x8xi32, #tpu.memory_space<vmem>>) attributes {dimension_semantics = [#tpu.dimension_semantics<parallel>], iteration_bounds = array<i64: 1>, scalar_prefetch = 0 : i64, scratch_operands = 0 : i64, tpu.core_type = #tpu.core_type<tc>, window_params = [{transform_indices = @transform_0, window_bounds = array<i64: 8, 8>}, {transform_indices = @transform_1, window_bounds = array<i64: 8, 8>}, {pipeline_mode = #tpu.pipeline_mode<synchronous>, transform_indices = @transform_2, window_bounds = array<i64: 8, 1>}, {pipeline_mode = #tpu.pipeline_mode<synchronous>, transform_indices = @transform_3, window_bounds = array<i64: 8, 1>}, {transform_indices = @transform_4, window_bounds = array<i64: 5, 8>}, {transform_indices = @transform_5, window_bounds = array<i64: 8, 8>}, {transform_indices = @transform_6, window_bounds = array<i64: 5, 8>}]} {
    %c0 = arith.constant 0 : index
    %c0_0 = arith.constant 0 : index
    %0 = vector.load %arg1[%c0, %c0_0] : memref<8x8xi8, #tpu.memory_space<vmem>>, vector<8x8xi8>
    %c0_i8 = arith.constant 0 : i8
    %1 = vector.broadcast %c0_i8 : i8 to vector<8x8xi8>
    %2 = arith.cmpi ne, %0, %1 : vector<8x8xi8>
    %c0_1 = arith.constant 0 : index
    %c0_2 = arith.constant 0 : index
    %3 = vector.load %arg2[%c0_1, %c0_2] : memref<8x8xf32, #tpu.memory_space<vmem>>, vector<8x8xf32>
    %c0_3 = arith.constant 0 : index
    %c0_4 = arith.constant 0 : index
    %4 = vector.load %arg3[%c0_3, %c0_4] : memref<8x1xf32, #tpu.memory_space<vmem>>, vector<8x1xf32>
    %c0_5 = arith.constant 0 : index
    %c0_6 = arith.constant 0 : index
    %5 = vector.load %arg4[%c0_5, %c0_6] : memref<8x1xf32, #tpu.memory_space<vmem>>, vector<8x1xf32>
    %cst = arith.constant dense<true> : vector<8x8xi1>
    %6 = arith.xori %2, %cst : vector<8x8xi1>
    %7 = vector.broadcast %5 : vector<8x1xf32> to vector<8x8xf32>
    %8 = arith.cmpf olt, %3, %7 : vector<8x8xf32>
    %9 = arith.andi %6, %8 : vector<8x8xi1>
    %10 = vector.broadcast %4 : vector<8x1xf32> to vector<8x8xf32>
    %11 = arith.cmpf oge, %3, %10 : vector<8x8xf32>
    %12 = arith.andi %2, %11 : vector<8x8xi1>
    %13 = arith.ori %2, %9 : vector<8x8xi1>
    %cst_7 = arith.constant dense<true> : vector<8x8xi1>
    %14 = arith.xori %12, %cst_7 : vector<8x8xi1>
    %15 = arith.andi %13, %14 : vector<8x8xi1>
    %16 = arith.extui %15 : vector<8x8xi1> to vector<8x8xi8>
    %c0_8 = arith.constant 0 : index
    %c0_9 = arith.constant 0 : index
    %17 = vector.load %arg6[%c0_8, %c0_9] : memref<8x8xi8, #tpu.memory_space<vmem>>, vector<8x8xi8>
    tpu.vector_store %arg6[%c0_8, %c0_9], %16 {strides = array<i32>} : memref<8x8xi8, #tpu.memory_space<vmem>>, vector<8x8xi8>,
    %18 = vector.extract_strided_slice %9 {offsets = [0, 0], sizes = [5, 8], strides = [1, 1]} : vector<8x8xi1> to vector<5x8xi1>
    %c0_10 = arith.constant 0 : index
    %c0_11 = arith.constant 0 : index
    %19 = vector.load %arg5[%c0_10, %c0_11] : memref<5x8xi32, #tpu.memory_space<vmem>>, vector<5x8xi32>
    %c-1_i32 = arith.constant -1 : i32
    %20 = vector.broadcast %c-1_i32 : i32 to vector<5x8xi32>
    %21 = arith.select %18, %20, %19 : vector<5x8xi1>, vector<5x8xi32>
    %c0_12 = arith.constant 0 : index
    %c0_13 = arith.constant 0 : index
    %22 = vector.load %arg7[%c0_12, %c0_13] : memref<5x8xi32, #tpu.memory_space<vmem>>, vector<5x8xi32>
    tpu.vector_store %arg7[%c0_12, %c0_13], %21 {strides = array<i32>} : memref<5x8xi32, #tpu.memory_space<vmem>>, vector<5x8xi32>,
    return
  }
  func.func @transform_0(%arg0: i32) -> (i32, i32) {
    %c0_i32 = arith.constant 0 : i32
    %c0_i32_0 = arith.constant 0 : i32
    return %c0_i32, %arg0 : i32, i32
  }
  func.func @transform_1(%arg0: i32) -> (i32, i32) {
    %c0_i32 = arith.constant 0 : i32
    %c0_i32_0 = arith.constant 0 : i32
    return %c0_i32, %arg0 : i32, i32
  }
  func.func @transform_2(%arg0: i32) -> (i32, i32) {
    %c0_i32 = arith.constant 0 : i32
    %c0_i32_0 = arith.constant 0 : i32
    %c0_i32_1 = arith.constant 0 : i32
    return %c0_i32, %c0_i32_0 : i32, i32
  }
  func.func @transform_3(%arg0: i32) -> (i32, i32) {
    %c0_i32 = arith.constant 0 : i32
    %c0_i32_0 = arith.constant 0 : i32
    %c0_i32_1 = arith.constant 0 : i32
    return %c0_i32, %c0_i32_0 : i32, i32
  }
  func.func @transform_4(%arg0: i32) -> (i32, i32) {
    %c0_i32 = arith.constant 0 : i32
    %c0_i32_0 = arith.constant 0 : i32
    return %c0_i32, %arg0 : i32, i32
  }
  func.func @transform_5(%arg0: i32) -> (i32, i32) {
    %c0_i32 = arith.constant 0 : i32
    %c0_i32_0 = arith.constant 0 : i32
    return %c0_i32, %arg0 : i32, i32
  }
  func.func @transform_6(%arg0: i32) -> (i32, i32) {
    %c0_i32 = arith.constant 0 : i32
    %c0_i32_0 = arith.constant 0 : i32
    return %c0_i32, %arg0 : i32, i32
  }
}

</mosaic_0001>

<llo_original>
// kernel: presence_transition.1
$region0: #{presence_transition.1}
  #allocation0 [shape = 'u32[]', space=smem, size = 0x4, offset = 0x4, fixed_abs, tag = 'smem constant byte address 0x4 - core index']
  #allocation1 [shape = 'u32[144,128]{1,0:T(1,128)}', space=vmem, size = 0x12000, scoped, tag = 'internal scratch']
  %s0 = inlined_call_operand.hbm [shape: s8[8,8], index: 0, kind: input, shape index: {}, may-alias: {0,5}]
  %s1 = inlined_call_operand.vmem [shape: f32[8,8], index: 1, kind: input, shape index: {}]
  %s2 = inlined_call_operand.vmem [shape: f32[8,1], index: 2, kind: input, shape index: {}]
  %s3 = inlined_call_operand.vmem [shape: f32[8,1], index: 3, kind: input, shape index: {}]
  %s4 = inlined_call_operand.hbm [shape: s32[5,8], index: 4, kind: input, shape index: {}, may-alias: {4,6}]
  %s5 = inlined_call_operand.hbm [shape: s8[8,8], index: 5, kind: output, shape index: {0}, may-alias: {0,5}]
  %s6 = inlined_call_operand.hbm [shape: s32[5,8], index: 6, kind: output, shape index: {1}, may-alias: {4,6}]
  %7 = xla_tuple %s5, %s6
  %s8 = sld [smem:[#allocation0]]
  $region46: #{presence_transition.1} parent=0
    _
  %s10 = ssub.s32 1, %s8
  %s11 = scalar_select 0, %s10, %s8
  $region1: #{presence_transition.1} parent=0
    #allocation2 [shape = 'u8[1024]{0}', space=vmem, size = 0x400, scoped, tag = 'input window, operand 0, single buffered']
    #allocation3 [shape = 's32[1]{0}', space=sflag, size = 0x4, scoped, tag = 'scoped memory for presence_transition.1']
    #allocation4 [shape = 's32[1]{0}', space=sflag, size = 0x4, scoped, tag = 'scoped memory for presence_transition.1']
    #allocation5 [shape = 'u8[4096]{0}', space=vmem, size = 0x1000, scoped, tag = 'input window, operand 4, single buffered']
    #allocation6 [shape = 's32[1]{0}', space=sflag, size = 0x4, scoped, tag = 'scoped memory for presence_transition.1']
    #allocation7 [shape = 'u8[1024]{0}', space=vmem, size = 0x400, scoped, tag = 'output window, operand 0, single buffered']
    #allocation8 [shape = 'u8[4096]{0}', space=vmem, size = 0x1000, scoped, tag = 'output window, operand 1, single buffered']
    #allocation9 [shape = 's32[1]{0}', space=sflag, size = 0x4, scoped, tag = 'scoped memory for presence_transition.1']
    %12 = vsyncpa [#allocation3], 0
    %13 = vsyncpa [#allocation6], 0
    %14 = vsyncpa [#allocation4], 0
    %15 = vsyncpa [#allocation9], 0
    // Predicated region
    $region2: #{presence_transition.1} parent=1 // pred_check
      _
    $region3: #{presence_transition.1} parent=1 // pred_check_branch
      %17 = sbr.rel (0) target = $region5
    $region4: #{presence_transition.1} parent=1 // pred_region
      %s19 = ssub.s32 32, 32
      %20 = vsyncadd [#allocation3], %s19
      %s22 = sshll.u32 [#allocation2], 4
      %s23 = int_to_ptr.vmem [resolvable:$true] %s22
      %25 = dma.hbm_to_vmem [thread:$0]  %s0, 32, %s23, [#allocation3]
    $region5: #{presence_transition.1} parent=1 // pred_fallthru
      _
    // Predicated region
    $region6: #{presence_transition.1} parent=1 // pred_check
      _
    $region7: #{presence_transition.1} parent=1 // pred_check_branch
      %27 = sbr.rel (0) target = $region9
    $region8: #{presence_transition.1} parent=1 // pred_region
      _
    $region9: #{presence_transition.1} parent=1 // pred_fallthru
      _
    // Predicated region
    $region10: #{presence_transition.1} parent=1 // pred_check
      _
    $region11: #{presence_transition.1} parent=1 // pred_check_branch
      %29 = sbr.rel (0) target = $region13
    $region12: #{presence_transition.1} parent=1 // pred_region
      _
    $region13: #{presence_transition.1} parent=1 // pred_fallthru
      _
    // Predicated region
    $region14: #{presence_transition.1} parent=1 // pred_check
      _
    $region15: #{presence_transition.1} parent=1 // pred_check_branch
      %31 = sbr.rel (0) target = $region17
    $region16: #{presence_transition.1} parent=1 // pred_region
      _
    $region17: #{presence_transition.1} parent=1 // pred_fallthru
      _
    // Predicated region
    $region18: #{presence_transition.1} parent=1 // pred_check
      _
    $region19: #{presence_transition.1} parent=1 // pred_check_branch
      %33 = sbr.rel (0) target = $region21
    $region20: #{presence_transition.1} parent=1 // pred_region
      %s35 = ssub.s32 128, 128
      %36 = vsyncadd [#allocation6], %s35
      %s38 = sshll.u32 [#allocation5], 4
      %s39 = int_to_ptr.vmem [resolvable:$true] %s38
      %41 = dma.hbm_to_vmem [thread:$0]  %s4, 128, %s39, [#allocation6]
    $region21: #{presence_transition.1} parent=1 // pred_fallthru
      _
    // Predicated region
    $region22: #{presence_transition.1} parent=1 // pred_check
      _
    $region23: #{presence_transition.1} parent=1 // pred_check_branch
      %43 = sbr.rel (0) target = $region25
    $region24: #{presence_transition.1} parent=1 // pred_region
      %44 = dma.done [#allocation3], 32
    $region25: #{presence_transition.1} parent=1 // pred_fallthru
      _
    // Predicated region
    $region26: #{presence_transition.1} parent=1 // pred_check
      _
    $region27: #{presence_transition.1} parent=1 // pred_check_branch
      %46 = sbr.rel (0) target = $region29
    $region28: #{presence_transition.1} parent=1 // pred_region
      %47 = dma.done [#allocation6], 128
    $region29: #{presence_transition.1} parent=1 // pred_fallthru
      _
    %v50 = vld [vmem:[#allocation2] sm:$0x3]
    %vm51 = vnez %v50
    %v52 = vld [vmem:[%s1] sm:$0xff]
    %v53 = vld [vmem:[%s2] sm:$0xff]
    %v54 = vld [vmem:[%s3] sm:$0xff]
    %vm55 = vmxor %vm51, 1
    %57 = vset.pattern.permute.xlu0 0
    %58 = vperm.xlu0 %57, %v54
    %v59 = vpop.permute.xlu0 %58
    %vm61 = vcmp.lt.f32.partialorder %v52, %v59
    %vm62 = vmpackc.low %vm61, %vm61
    %vm63 = vmpackc.even %vm62, %vm62
    %vm64 = vmand %vm55, %vm63
    %66 = vset.pattern.permute.xlu0 0
    %67 = vperm.xlu0 %66, %v53
    %v68 = vpop.permute.xlu0 %67
    %vm70 = vcmp.ge.f32.partialorder %v52, %v68
    %vm71 = vmpackc.low %vm70, %vm70
    %vm72 = vmpackc.even %vm71, %vm71
    %vm73 = vmand %vm51, %vm72
    %vm74 = vmor %vm51, %vm64
    %vm75 = vmxor %vm73, 1
    %vm76 = vmand %vm74, %vm75
    %v77 = vsel %vm76, 16843009, 0
    %vm78 = vcmask 58368
    %79 = vst.msk [vmem:[#allocation7] sm:$0x3] %vm78, %v77
    %v80 = vld [vmem:[#allocation5] sm:$0x1f]
    %v81 = vsel %vm64, 16843009, 0
    %v82 = vunpack.c.0.s8 %v81
    %vm83 = vcmp.ne.s32.totalorder %v82, 0
    %v84 = vsel %vm83, 4294967295, %v80
    %vm85 = vcmask 61440
    %86 = vst.msk [vmem:[#allocation8] sm:$0x1f] %vm85, %v84
    // Predicated region
    $region30: #{presence_transition.1} parent=1 // pred_check
      _
    $region31: #{presence_transition.1} parent=1 // pred_check_branch
      %88 = sbr.rel (0) target = $region33
    $region32: #{presence_transition.1} parent=1 // pred_region
      %s90 = ssub.s32 32, 32
      %91 = vsyncadd [#allocation4], %s90
      %s93 = sshll.u32 [#allocation7], 4
      %s94 = int_to_ptr.vmem [resolvable:$true] %s93
      %96 = dma.vmem_to_hbm [thread:$0]  %s94, 32, %s5, [#allocation4]
    $region33: #{presence_transition.1} parent=1 // pred_fallthru
      _
    // Predicated region
    $region34: #{presence_transition.1} parent=1 // pred_check
      _
    $region35: #{presence_transition.1} parent=1 // pred_check_branch
      %98 = sbr.rel (0) target = $region37
    $region36: #{presence_transition.1} parent=1 // pred_region
      %s100 = ssub.s32 128, 128
      %101 = vsyncadd [#allocation9], %s100
      %s103 = sshll.u32 [#allocation8], 4
      %s104 = int_to_ptr.vmem [resolvable:$true] %s103
      %106 = dma.vmem_to_hbm [thread:$0]  %s104, 128, %s6, [#allocation9]
    $region37: #{presence_transition.1} parent=1 // pred_fallthru
      _
    // Predicated region
    $region38: #{presence_transition.1} parent=1 // pred_check
      _
    $region39: #{presence_transition.1} parent=1 // pred_check_branch
      %108 = sbr.rel (0) target = $region41
    $region40: #{presence_transition.1} parent=1 // pred_region
      %109 = dma.done [#allocation4], 32
    $region41: #{presence_transition.1} parent=1 // pred_fallthru
      _
    // Predicated region
    $region42: #{presence_transition.1} parent=1 // pred_check
      _
    $region43: #{presence_transition.1} parent=1 // pred_check_branch
      %111 = sbr.rel (0) target = $region45
    $region44: #{presence_transition.1} parent=1 // pred_region
      %112 = dma.done [#allocation9], 128
    $region45: #{presence_transition.1} parent=1 // pred_fallthru
      _
    %113 = vsyncpa [#allocation3], 1
    %114 = vsyncpa [#allocation6], 1
    %115 = vsyncpa [#allocation4], 1
    %116 = vsyncpa [#allocation9], 1

</llo_original>
